<compile_context>
chip_gen: v6e
topology: v6e:2x2x1
jax: 0.10.0
libtpu: 0.0.40
codegen_flags: <defaults>
</compile_context>

<pallas_src>
from functools import partial

import jax
import jax.numpy as jnp
import numpy as np
from jax.experimental import pallas as pl
from jax.experimental.pallas import tpu as pltpu


def _kp3d_loss_kernel(pred_ref, gt_ref, out_ref, *, pelvis_id, use_conf,
                      loss_type, upcast_early, bcast_via_stride0):
    # pred_ref: [B, N, 3]   gt_ref: [B, N, 4] (or [B, N, 3] when use_conf=False)
    f32 = jnp.float32
    N = pred_ref.shape[1]

    pred = pred_ref[...]                                   # [B, N, 3]
    gt = gt_ref[...]                                       # [B, N, C_gt]
    gt_xyz = gt[:, :, :3] if use_conf else gt              # [B, N, 3]

    if bcast_via_stride0:
        # stride-0 sublane loads: pelvis row replicated across all N sublanes
        # in the load path (no XLU relayout / materialized broadcast).
        pred_p = pred_ref[:, pl.ds(pelvis_id, N, stride=0), :]     # [B, N, 3]
        gt_p = gt_ref[:, pl.ds(pelvis_id, N, stride=0), :]         # [B, N, C_gt]
        gt_p = gt_p[:, :, :3] if use_conf else gt_p                # [B, N, 3]
    else:
        # Fallback: value-level pelvis row, broadcast over N by the subtraction.
        pred_p = pred[:, pelvis_id:pelvis_id + 1, :]               # [B, 1, 3]
        gt_p = gt_xyz[:, pelvis_id:pelvis_id + 1, :]               # [B, 1, 3]

    if upcast_early:
        # v5e: no bf16 VPU path -> do all elementwise math in f32.
        pred = pred.astype(f32)
        gt_xyz = gt_xyz.astype(f32)
        pred_p = pred_p.astype(f32)
        gt_p = gt_p.astype(f32)

    # Same association as PyTorch: center each, then subtract.
    cdiff = (pred - pred_p) - (gt_xyz - gt_p)                      # [B, N, 3]

    if loss_type == "l1":
        per_elem = jnp.abs(cdiff)          # nn.L1Loss(reduction='none')
    elif loss_type == "l2":
        c = cdiff if cdiff.dtype == f32 else cdiff.astype(f32)
        per_elem = c * c                   # nn.MSELoss(reduction='none'), squared in f32
    else:
        raise NotImplementedError("Unsupported loss function")

    # Accumulate the reduction in f32 (cast is a no-op for f32 inputs).
    if per_elem.dtype != f32:
        per_elem = per_elem.astype(f32)

    if use_conf:
        conf = gt[:, :, 3:4]                                       # [B, N, 1]
        if conf.dtype != f32:
            conf = conf.astype(f32)
        # sum_{b,n,c} conf*e == sum_{b,n} conf * sum_c e : avoids the
        # [B,N,1] -> [B,N,3] lane-broadcast relayout entirely.
        per_kp = jnp.sum(per_elem, axis=2, keepdims=True)          # [B, N, 1]
        out_ref[0] = jnp.sum(conf * per_kp)
    else:
        out_ref[0] = jnp.sum(per_elem)


def _stride0_ds_supported():
    """Probe whether this JAX build accepts stride=0 in pl.ds (broadcast load)."""
    try:
        pl.ds(0, 2, stride=0)
    except Exception:
        return False
    return True


_HAS_STRIDE0_DS = _stride0_ds_supported()


def _is_pre_v6_tpu():
    """Best-effort chip check: v5e and older have no bf16 VPU/EUP path."""
    try:
        kind = jax.devices()[0].device_kind.lower()
    except Exception:
        return False
    return not any(tag in kind for tag in ("v6", "v7", "6e", "7x", "7e"))


def keypoint_3d_loss(pred_keypoints_3d, gt_keypoints_3d, pelvis_id=39, loss_type="l1"):
    """pred_keypoints_3d: [B, N, 3]; gt_keypoints_3d: [B, N, 4] (or [B, N, 3])."""
    B, N, _ = pred_keypoints_3d.shape
    C_gt = gt_keypoints_3d.shape[-1]
    use_conf = C_gt == 4

    # v5e-only early upcast of sub-f32 inputs; v6e/v7x keep narrow elementwise math.
    narrow = (pred_keypoints_3d.dtype != jnp.float32
              or gt_keypoints_3d.dtype != jnp.float32)
    upcast_early = narrow and _is_pre_v6_tpu()

    def build(bcast_via_stride0):
        return pl.pallas_call(
            partial(
                _kp3d_loss_kernel,
                pelvis_id=pelvis_id,
                use_conf=use_conf,
                loss_type=loss_type,
                upcast_early=upcast_early,
                bcast_via_stride0=bcast_via_stride0,
            ),
            out_shape=jax.ShapeDtypeStruct((1,), jnp.float32),     # 1-D SMEM scalar
            in_specs=[
                pl.BlockSpec(memory_space=pltpu.VMEM),             # full-array VMEM block
                pl.BlockSpec(memory_space=pltpu.VMEM),
            ],
            out_specs=pl.BlockSpec(memory_space=pltpu.SMEM),
        )

    if _HAS_STRIDE0_DS:
        try:
            return build(True)(pred_keypoints_3d, gt_keypoints_3d)[0]
        except Exception:
            # stride-0 broadcast load rejected by this lowering; use the
            # value-level broadcast fallback (identical semantics).
            pass
    return build(False)(pred_keypoints_3d, gt_keypoints_3d)[0]


def _reference_loss(pred, gt, pelvis_id=39, loss_type="l1"):
    """Pure-JAX reference matching the PyTorch forward (for verification)."""
    use_conf = gt.shape[-1] == 4
    pred = pred - pred[:, pelvis_id, :][:, None, :]
    if use_conf:
        gt_xyz = gt[:, :, :3] - gt[:, pelvis_id, :3][:, None, :]
        conf = gt[:, :, 3:4]
    else:
        gt_xyz = gt - gt[:, pelvis_id, :][:, None, :]
        conf = None
    diff = pred - gt_xyz
    per_elem = jnp.abs(diff) if loss_type == "l1" else diff * diff
    if use_conf:
        per_elem = conf * per_elem
    return per_elem.sum(axis=(1, 2)).sum()


if __name__ == "__main__":
    # Small deterministic example: B=2, N=44 keypoints (default pelvis_id=39 valid).
    key = jax.random.PRNGKey(0)
    k1, k2, k3 = jax.random.split(key, 3)
    B, N = 2, 44
    pred = jax.random.normal(k1, (B, N, 3), dtype=jnp.float32)
    gt_xyz = jax.random.normal(k2, (B, N, 3), dtype=jnp.float32)
    conf = jax.random.uniform(k3, (B, N, 1), dtype=jnp.float32)
    gt = jnp.concatenate([gt_xyz, conf], axis=-1)  # [B, N, 4]

    # l1 with confidence channel
    loss = keypoint_3d_loss(pred, gt, pelvis_id=39, loss_type="l1")
    loss = jax.block_until_ready(loss)
    ref = _reference_loss(pred, gt, pelvis_id=39, loss_type="l1")
    assert np.allclose(np.asarray(loss), np.asarray(ref), rtol=1e-5, atol=1e-5)

    # l2 without confidence channel (exercises the other static paths)
    loss2 = keypoint_3d_loss(pred, gt_xyz, pelvis_id=39, loss_type="l2")
    loss2 = jax.block_until_ready(loss2)
    ref2 = _reference_loss(pred, gt_xyz, pelvis_id=39, loss_type="l2")
    assert np.allclose(np.asarray(loss2), np.asarray(ref2), rtol=1e-5, atol=1e-5)

    print("KERNEL_OK")
</pallas_src>

<mosaic_0001>
module attributes {stable_mosaic.version = 11 : i64} {
  func.func @_kp3d_loss_kernel(%arg0: memref<2x44x3xf32, #tpu.memory_space<vmem>>, %arg1: memref<2x44x4xf32, #tpu.memory_space<vmem>>, %arg2: memref<1xf32, #tpu.memory_space<smem>>) attributes {dimension_semantics = [], scalar_prefetch = 0 : i64, scratch_operands = 0 : i64, tpu.core_type = #tpu.core_type<tc>} {
    %c0 = arith.constant 0 : index
    %c0_0 = arith.constant 0 : index
    %c0_1 = arith.constant 0 : index
    %0 = vector.load %arg0[%c0, %c0_0, %c0_1] : memref<2x44x3xf32, #tpu.memory_space<vmem>>, vector<2x44x3xf32>
    %c0_2 = arith.constant 0 : index
    %c0_3 = arith.constant 0 : index
    %c0_4 = arith.constant 0 : index
    %1 = vector.load %arg1[%c0_2, %c0_3, %c0_4] : memref<2x44x4xf32, #tpu.memory_space<vmem>>, vector<2x44x4xf32>
    %2 = vector.extract_strided_slice %1 {offsets = [0, 0, 0], sizes = [2, 44, 3], strides = [1, 1, 1]} : vector<2x44x4xf32> to vector<2x44x3xf32>
    %c0_5 = arith.constant 0 : index
    %c39 = arith.constant 39 : index
    %c0_6 = arith.constant 0 : index
    %3 = tpu.strided_load %arg0[%c0_5, %c39, %c0_6] {strides = array<i32: 1, 0, 1>} : memref<2x44x3xf32, #tpu.memory_space<vmem>>, vector<2x44x3xf32>
    %c0_7 = arith.constant 0 : index
    %c39_8 = arith.constant 39 : index
    %c0_9 = arith.constant 0 : index
    %4 = tpu.strided_load %arg1[%c0_7, %c39_8, %c0_9] {strides = array<i32: 1, 0, 1>} : memref<2x44x4xf32, #tpu.memory_space<vmem>>, vector<2x44x4xf32>
    %5 = vector.extract_strided_slice %4 {offsets = [0, 0, 0], sizes = [2, 44, 3], strides = [1, 1, 1]} : vector<2x44x4xf32> to vector<2x44x3xf32>
    %6 = arith.subf %0, %3 : vector<2x44x3xf32>
    %7 = arith.subf %2, %5 : vector<2x44x3xf32>
    %8 = arith.subf %6, %7 : vector<2x44x3xf32>
    %9 = math.absf %8 : vector<2x44x3xf32>
    %10 = vector.extract_strided_slice %1 {offsets = [0, 0, 3], sizes = [2, 44, 1], strides = [1, 1, 1]} : vector<2x44x4xf32> to vector<2x44x1xf32>
    %cst = arith.constant dense<0.000000e+00> : vector<2x44xf32>
    %11 = vector.multi_reduction <add>, %9, %cst [2] : vector<2x44x3xf32> to vector<2x44xf32>
    %12 = vector.shape_cast %11 : vector<2x44xf32> to vector<2x44x1xf32>
    %13 = arith.mulf %10, %12 : vector<2x44x1xf32>
    %14 = vector.shape_cast %13 : vector<2x44x1xf32> to vector<1x2x44x1xf32>
    %cst_10 = arith.constant dense<0.000000e+00> : vector<1xf32>
    %15 = vector.multi_reduction <add>, %14, %cst_10 [1, 2, 3] : vector<1x2x44x1xf32> to vector<1xf32>
    %16 = vector.shape_cast %15 : vector<1xf32> to vector<1x1x1x1xf32>
    %17 = vector.extract %16[0, 0, 0, 0] : f32 from vector<1x1x1x1xf32>
    %c0_11 = arith.constant 0 : index
    %18 = memref.load %arg2[%c0_11] : memref<1xf32, #tpu.memory_space<smem>>
    memref.store %17, %arg2[%c0_11] : memref<1xf32, #tpu.memory_space<smem>>
    return
  }
}

module attributes {stable_mosaic.version = 11 : i64} {
  func.func @_kp3d_loss_kernel(%arg0: memref<2x44x3xf32, #tpu.memory_space<vmem>>, %arg1: memref<2x44x4xf32, #tpu.memory_space<vmem>>, %arg2: memref<1xf32, #tpu.memory_space<smem>>) attributes {dimension_semantics = [], scalar_prefetch = 0 : i64, scratch_operands = 0 : i64, tpu.core_type = #tpu.core_type<tc>} {
    %c0 = arith.constant 0 : index
    %c0_0 = arith.constant 0 : index
    %c0_1 = arith.constant 0 : index
    %0 = vector.load %arg0[%c0, %c0_0, %c0_1] : memref<2x44x3xf32, #tpu.memory_space<vmem>>, vector<2x44x3xf32>
    %c0_2 = arith.constant 0 : index
    %c0_3 = arith.constant 0 : index
    %c0_4 = arith.constant 0 : index
    %1 = vector.load %arg1[%c0_2, %c0_3, %c0_4] : memref<2x44x4xf32, #tpu.memory_space<vmem>>, vector<2x44x4xf32>
    %2 = vector.extract_strided_slice %1 {offsets = [0, 0, 0], sizes = [2, 44, 3], strides = [1, 1, 1]} : vector<2x44x4xf32> to vector<2x44x3xf32>
    %3 = vector.extract_strided_slice %0 {offsets = [0, 39, 0], sizes = [2, 1, 3], strides = [1, 1, 1]} : vector<2x44x3xf32> to vector<2x1x3xf32>
    %4 = vector.extract_strided_slice %2 {offsets = [0, 39, 0], sizes = [2, 1, 3], strides = [1, 1, 1]} : vector<2x44x3xf32> to vector<2x1x3xf32>
    %5 = vector.broadcast %3 : vector<2x1x3xf32> to vector<2x44x3xf32>
    %6 = arith.subf %0, %5 : vector<2x44x3xf32>
    %7 = vector.broadcast %4 : vector<2x1x3xf32> to vector<2x44x3xf32>
    %8 = arith.subf %2, %7 : vector<2x44x3xf32>
    %9 = arith.subf %6, %8 : vector<2x44x3xf32>
    %10 = math.absf %9 : vector<2x44x3xf32>
    %11 = vector.extract_strided_slice %1 {offsets = [0, 0, 3], sizes = [2, 44, 1], strides = [1, 1, 1]} : vector<2x44x4xf32> to vector<2x44x1xf32>
    %cst = arith.constant dense<0.000000e+00> : vector<2x44xf32>
    %12 = vector.multi_reduction <add>, %10, %cst [2] : vector<2x44x3xf32> to vector<2x44xf32>
    %13 = vector.shape_cast %12 : vector<2x44xf32> to vector<2x44x1xf32>
    %14 = arith.mulf %11, %13 : vector<2x44x1xf32>
    %15 = vector.shape_cast %14 : vector<2x44x1xf32> to vector<1x2x44x1xf32>
    %cst_5 = arith.constant dense<0.000000e+00> : vector<1xf32>
    %16 = vector.multi_reduction <add>, %15, %cst_5 [1, 2, 3] : vector<1x2x44x1xf32> to vector<1xf32>
    %17 = vector.shape_cast %16 : vector<1xf32> to vector<1x1x1x1xf32>
    %18 = vector.extract %17[0, 0, 0, 0] : f32 from vector<1x1x1x1xf32>
    %c0_6 = arith.constant 0 : index
    %19 = memref.load %arg2[%c0_6] : memref<1xf32, #tpu.memory_space<smem>>
    memref.store %18, %arg2[%c0_6] : memref<1xf32, #tpu.memory_space<smem>>
    return
  }
}

</mosaic_0001>

<llo_original>
// kernel: tpu_custom_call.1
$region0: #{tpu_custom_call.1}
  #allocation0 [shape = 'u32[]', space=smem, size = 0x4, offset = 0x4, fixed_abs, tag = 'smem constant byte address 0x4 - core index']
  #allocation1 [shape = 'u32[144,128]{1,0:T(1,128)}', space=vmem, size = 0x12000, scoped, tag = 'internal scratch']
  %s0 = inlined_call_operand.vmem [shape: f32[2,44,3], index: 0, kind: input, shape index: {}]
  %s1 = inlined_call_operand.vmem [shape: f32[2,44,4], index: 1, kind: input, shape index: {}]
  %s2 = inlined_call_operand.hbm [shape: f32[1], index: 2, kind: output, shape index: {}]
  %s3 = sld [smem:[#allocation0]]
  $region18: #{tpu_custom_call.1} parent=0
    _
  %s5 = ssub.s32 1, %s3
  %s6 = scalar_select 0, %s5, %s3
  $region1: #{tpu_custom_call.1} parent=0
    #allocation2 [shape = 'u8[512]{0}', space=smem, size = 0x200, scoped, tag = 'output window, operand 0, single buffered']
    #allocation3 [shape = 's32[1]{0}', space=sflag, size = 0x4, scoped, tag = 'scoped memory for tpu_custom_call.1']
    %7 = vsyncpa [#allocation3], 0
    // Predicated region
    $region2: #{tpu_custom_call.1} parent=1 // pred_check
      _
    $region3: #{tpu_custom_call.1} parent=1 // pred_check_branch
      %9 = sbr.rel (0) target = $region5
    $region4: #{tpu_custom_call.1} parent=1 // pred_region
      _
    $region5: #{tpu_custom_call.1} parent=1 // pred_fallthru
      _
    // Predicated region
    $region6: #{tpu_custom_call.1} parent=1 // pred_check
      _
    $region7: #{tpu_custom_call.1} parent=1 // pred_check_branch
      %11 = sbr.rel (0) target = $region9
    $region8: #{tpu_custom_call.1} parent=1 // pred_region
      _
    $region9: #{tpu_custom_call.1} parent=1 // pred_fallthru
      _
    %v12 = vld [vmem:[%s0] sm:$0xff]
    %v13 = vld [vmem:[%s0 + $0x8] sm:$0xff]
    %v14 = vld [vmem:[%s0 + $0x10] sm:$0xff]
    %v15 = vld [vmem:[%s0 + $0x18] sm:$0xff]
    %v16 = vld [vmem:[%s0 + $0x20] sm:$0xff]
    %v17 = vld [vmem:[%s0 + $0x28] sm:$0xf]
    %v18 = vld [vmem:[%s0 + $0x30] sm:$0xff]
    %v19 = vld [vmem:[%s0 + $0x38] sm:$0xff]
    %v20 = vld [vmem:[%s0 + $0x40] sm:$0xff]
    %v21 = vld [vmem:[%s0 + $0x48] sm:$0xff]
    %v22 = vld [vmem:[%s0 + $0x50] sm:$0xff]
    %v23 = vld [vmem:[%s0 + $0x58] sm:$0xf]
    %v24 = vld [vmem:[%s1] sm:$0xff]
    %v25 = vld [vmem:[%s1 + $0x8] sm:$0xff]
    %v26 = vld [vmem:[%s1 + $0x10] sm:$0xff]
    %v27 = vld [vmem:[%s1 + $0x18] sm:$0xff]
    %v28 = vld [vmem:[%s1 + $0x20] sm:$0xff]
    %v29 = vld [vmem:[%s1 + $0x28] sm:$0xf]
    %v30 = vld [vmem:[%s1 + $0x30] sm:$0xff]
    %v31 = vld [vmem:[%s1 + $0x38] sm:$0xff]
    %v32 = vld [vmem:[%s1 + $0x40] sm:$0xff]
    %v33 = vld [vmem:[%s1 + $0x48] sm:$0xff]
    %v34 = vld [vmem:[%s1 + $0x50] sm:$0xff]
    %v35 = vld [vmem:[%s1 + $0x58] sm:$0xf]
    %v36 = vld [vmem:[%s0 + $0x27] ss:$0 sm:$0xff]
    %v37 = vld [vmem:[%s0 + $0x27] ss:$0 sm:$0xf]
    %v38 = vld [vmem:[%s0 + $0x57] ss:$0 sm:$0xff]
    %v39 = vld [vmem:[%s0 + $0x57] ss:$0 sm:$0xf]
    %v40 = vld [vmem:[%s1 + $0x27] ss:$0 sm:$0xff]
    %v41 = vld [vmem:[%s1 + $0x27] ss:$0 sm:$0xf]
    %v42 = vld [vmem:[%s1 + $0x57] ss:$0 sm:$0xff]
    %v43 = vld [vmem:[%s1 + $0x57] ss:$0 sm:$0xf]
    %v44 = vsub.f32 %v12, %v36
    %v45 = vsub.f32 %v13, %v36
    %v46 = vsub.f32 %v14, %v36
    %v47 = vsub.f32 %v15, %v36
    %v48 = vsub.f32 %v16, %v36
    %v49 = vsub.f32 %v17, %v37
    %v50 = vsub.f32 %v18, %v38
    %v51 = vsub.f32 %v19, %v38
    %v52 = vsub.f32 %v20, %v38
    %v53 = vsub.f32 %v21, %v38
    %v54 = vsub.f32 %v22, %v38
    %v55 = vsub.f32 %v23, %v39
    %v56 = vsub.f32 %v24, %v40
    %v57 = vsub.f32 %v25, %v40
    %v58 = vsub.f32 %v26, %v40
    %v59 = vsub.f32 %v27, %v40
    %v60 = vsub.f32 %v28, %v40
    %v61 = vsub.f32 %v29, %v41
    %v62 = vsub.f32 %v30, %v42
    %v63 = vsub.f32 %v31, %v42
    %v64 = vsub.f32 %v32, %v42
    %v65 = vsub.f32 %v33, %v42
    %v66 = vsub.f32 %v34, %v42
    %v67 = vsub.f32 %v35, %v43
    %v68 = vsub.f32 %v44, %v56
    %v69 = vsub.f32 %v45, %v57
    %v70 = vsub.f32 %v46, %v58
    %v71 = vsub.f32 %v47, %v59
    %v72 = vsub.f32 %v48, %v60
    %v73 = vsub.f32 %v49, %v61
    %v74 = vsub.f32 %v50, %v62
    %v75 = vsub.f32 %v51, %v63
    %v76 = vsub.f32 %v52, %v64
    %v77 = vsub.f32 %v53, %v65
    %v78 = vsub.f32 %v54, %v66
    %v79 = vsub.f32 %v55, %v67
    %v80 = vand.u32 2147483647, %v68
    %v81 = vand.u32 2147483647, %v69
    %v82 = vand.u32 2147483647, %v70
    %v83 = vand.u32 2147483647, %v71
    %v84 = vand.u32 2147483647, %v72
    %v85 = vand.u32 2147483647, %v73
    %v86 = vand.u32 2147483647, %v74
    %v87 = vand.u32 2147483647, %v75
    %v88 = vand.u32 2147483647, %v76
    %v89 = vand.u32 2147483647, %v77
    %v90 = vand.u32 2147483647, %v78
    %v91 = vand.u32 2147483647, %v79
    %vm92 = vcmask 23552
    %v93 = vsel %vm92, %v80, 0.0
    %94 = vadd.xlane.f32.xlu0 %v93
    %v95 = vpop.xlane.xlu0 %94
    %v96 = vsel %vm92, %v81, 0.0
    %97 = vadd.xlane.f32.xlu0 %v96
    %v98 = vpop.xlane.xlu0 %97
    %v99 = vsel %vm92, %v82, 0.0
    %100 = vadd.xlane.f32.xlu0 %v99
    %v101 = vpop.xlane.xlu0 %100
    %v102 = vsel %vm92, %v83, 0.0
    %103 = vadd.xlane.f32.xlu0 %v102
    %v104 = vpop.xlane.xlu0 %103
    %v105 = vsel %vm92, %v84, 0.0
    %106 = vadd.xlane.f32.xlu0 %v105
    %v107 = vpop.xlane.xlu0 %106
    %vm108 = vcmask 19456
    %v109 = vsel %vm108, %v85, 0.0
    %110 = vadd.xlane.f32.xlu0 %v109
    %v111 = vpop.xlane.xlu0 %110
    %v112 = vsel %vm92, %v86, 0.0
    %113 = vadd.xlane.f32.xlu0 %v112
    %v114 = vpop.xlane.xlu0 %113
    %v115 = vsel %vm92, %v87, 0.0
    %116 = vadd.xlane.f32.xlu0 %v115
    %v117 = vpop.xlane.xlu0 %116
    %v118 = vsel %vm92, %v88, 0.0
    %119 = vadd.xlane.f32.xlu0 %v118
    %v120 = vpop.xlane.xlu0 %119
    %v121 = vsel %vm92, %v89, 0.0
    %122 = vadd.xlane.f32.xlu0 %v121
    %v123 = vpop.xlane.xlu0 %122
    %v124 = vsel %vm92, %v90, 0.0
    %125 = vadd.xlane.f32.xlu0 %v124
    %v126 = vpop.xlane.xlu0 %125
    %v127 = vsel %vm108, %v91, 0.0
    %128 = vadd.xlane.f32.xlu0 %v127
    %v129 = vpop.xlane.xlu0 %128
    %v130 = vmul.f32 %v24, %v95
    %v131 = vmul.f32 %v25, %v98
    %v132 = vmul.f32 %v26, %v101
    %v133 = vmul.f32 %v27, %v104
    %v134 = vmul.f32 %v28, %v107
    %v135 = vmul.f32 %v29, %v111
    %v136 = vmul.f32 %v30, %v114
    %v137 = vmul.f32 %v31, %v117
    %v138 = vmul.f32 %v32, %v120
    %v139 = vmul.f32 %v33, %v123
    %v140 = vmul.f32 %v34, %v126
    %v141 = vmul.f32 %v35, %v129
    %154 = vrot.lane.b32.xlu0 %v130, 125
    %v155 = vpop.permute.xlu0 %154
    %156 = vrot.lane.b32.xlu0 %v131, 125
    %v157 = vpop.permute.xlu0 %156
    %158 = vrot.lane.b32.xlu0 %v132, 125
    %v159 = vpop.permute.xlu0 %158
    %160 = vrot.lane.b32.xlu0 %v133, 125
    %v161 = vpop.permute.xlu0 %160
    %162 = vrot.lane.b32.xlu0 %v134, 125
    %v163 = vpop.permute.xlu0 %162
    %164 = vrot.lane.b32.xlu0 %v135, 125
    %v165 = vpop.permute.xlu0 %164
    %166 = vrot.lane.b32.xlu0 %v136, 125
    %v167 = vpop.permute.xlu0 %166
    %168 = vrot.lane.b32.xlu0 %v137, 125
    %v169 = vpop.permute.xlu0 %168
    %170 = vrot.lane.b32.xlu0 %v138, 125
    %v171 = vpop.permute.xlu0 %170
    %172 = vrot.lane.b32.xlu0 %v139, 125
    %v173 = vpop.permute.xlu0 %172
    %174 = vrot.lane.b32.xlu0 %v140, 125
    %v175 = vpop.permute.xlu0 %174
    %176 = vrot.lane.b32.xlu0 %v141, 125
    %v177 = vpop.permute.xlu0 %176
    %vm190 = vcmask 7168
    %v191 = vsel %vm190, %v155, 0.0
    %v192 = vsel %vm190, %v157, 0.0
    %v193 = vadd.f32 %v191, %v192
    %v194 = vsel %vm190, %v159, 0.0
    %v195 = vadd.f32 %v193, %v194
    %v196 = vsel %vm190, %v161, 0.0
    %v197 = vadd.f32 %v195, %v196
    %v198 = vsel %vm190, %v163, 0.0
    %v199 = vadd.f32 %v197, %v198
    %vm200 = vcmask 3072
    %v201 = vsel %vm200, %v165, 0.0
    %v202 = vadd.f32 %v199, %v201
    %v203 = vsel %vm190, %v167, 0.0
    %v204 = vadd.f32 %v202, %v203
    %v205 = vsel %vm190, %v169, 0.0
    %v206 = vadd.f32 %v204, %v205
    %v207 = vsel %vm190, %v171, 0.0
    %v208 = vadd.f32 %v206, %v207
    %v209 = vsel %vm190, %v173, 0.0
    %v210 = vadd.f32 %v208, %v209
    %v211 = vsel %vm190, %v175, 0.0
    %v212 = vadd.f32 %v210, %v211
    %v213 = vsel %vm200, %v177, 0.0
    %v214 = vadd.f32 %v212, %v213
    %215 = vadd.xlane.f32.xlu0 %v214
    %v216 = vpop.xlane.xlu0 %215
    %v217 = vrot.slane %v216, 4
    %v218 = vadd.f32 %v216, %v217
    %v219 = vrot.slane %v218, 2
    %v220 = vadd.f32 %v218, %v219
    %v221 = vrot.slane %v220, 1
    %v222 = vadd.f32 %v220, %v221
    %s223 = vtos %v222
    %s224 = scalar_lea.smem [#allocation2], 0
    %225 = sst [smem:[%s224]] %s223
    // Predicated region
    $region10: #{tpu_custom_call.1} parent=1 // pred_check
      _
    $region11: #{tpu_custom_call.1} parent=1 // pred_check_branch
      %227 = sbr.rel (0) target = $region13
    $region12: #{tpu_custom_call.1} parent=1 // pred_region
      %s229 = ssub.s32 16, 16
      %230 = vsyncadd [#allocation3], %s229
      %233 = dma.smem_to_hbm [#allocation2], 16, %s2, [#allocation3]
    $region13: #{tpu_custom_call.1} parent=1 // pred_fallthru
      _
    // Predicated region
    $region14: #{tpu_custom_call.1} parent=1 // pred_check
      _
    $region15: #{tpu_custom_call.1} parent=1 // pred_check_branch
      %235 = sbr.rel (0) target = $region17
    $region16: #{tpu_custom_call.1} parent=1 // pred_region
      %236 = dma.done [#allocation3], 16
    $region17: #{tpu_custom_call.1} parent=1 // pred_fallthru
      _
    %237 = sfence
    %238 = vsyncpa [#allocation3], 1

// kernel: tpu_custom_call.1
$region0: #{tpu_custom_call.1}
  #allocation0 [shape = 'u32[]', space=smem, size = 0x4, offset = 0x4, fixed_abs, tag = 'smem constant byte address 0x4 - core index']
  #allocation1 [shape = 'u32[144,128]{1,0:T(1,128)}', space=vmem, size = 0x12000, scoped, tag = 'internal scratch']
  %s0 = inlined_call_operand.vmem [shape: f32[2,44,3], index: 0, kind: input, shape index: {}]
  %s1 = inlined_call_operand.vmem [shape: f32[2,44,4], index: 1, kind: input, shape index: {}]
  %s2 = inlined_call_operand.hbm [shape: f32[1], index: 2, kind: output, shape index: {}]
  %s3 = sld [smem:[#allocation0]]
  $region18: #{tpu_custom_call.1} parent=0
    _
  %s5 = ssub.s32 1, %s3
  %s6 = scalar_select 0, %s5, %s3
  $region1: #{tpu_custom_call.1} parent=0
    #allocation2 [shape = 'u8[512]{0}', space=smem, size = 0x200, scoped, tag = 'output window, operand 0, single buffered']
    #allocation3 [shape = 's32[1]{0}', space=sflag, size = 0x4, scoped, tag = 'scoped memory for tpu_custom_call.1']
    %7 = vsyncpa [#allocation3], 0
    // Predicated region
    $region2: #{tpu_custom_call.1} parent=1 // pred_check
      _
    $region3: #{tpu_custom_call.1} parent=1 // pred_check_branch
      %9 = sbr.rel (0) target = $region5
    $region4: #{tpu_custom_call.1} parent=1 // pred_region
      _
    $region5: #{tpu_custom_call.1} parent=1 // pred_fallthru
      _
    // Predicated region
    $region6: #{tpu_custom_call.1} parent=1 // pred_check
      _
    $region7: #{tpu_custom_call.1} parent=1 // pred_check_branch
      %11 = sbr.rel (0) target = $region9
    $region8: #{tpu_custom_call.1} parent=1 // pred_region
      _
    $region9: #{tpu_custom_call.1} parent=1 // pred_fallthru
      _
    %v12 = vld [vmem:[%s0] sm:$0xff]
    %v13 = vld [vmem:[%s0 + $0x8] sm:$0xff]
    %v14 = vld [vmem:[%s0 + $0x10] sm:$0xff]
    %v15 = vld [vmem:[%s0 + $0x18] sm:$0xff]
    %v16 = vld [vmem:[%s0 + $0x20] sm:$0xff]
    %v17 = vld [vmem:[%s0 + $0x28] sm:$0xf]
    %v18 = vld [vmem:[%s0 + $0x30] sm:$0xff]
    %v19 = vld [vmem:[%s0 + $0x38] sm:$0xff]
    %v20 = vld [vmem:[%s0 + $0x40] sm:$0xff]
    %v21 = vld [vmem:[%s0 + $0x48] sm:$0xff]
    %v22 = vld [vmem:[%s0 + $0x50] sm:$0xff]
    %v23 = vld [vmem:[%s0 + $0x58] sm:$0xf]
    %v24 = vld [vmem:[%s1] sm:$0xff]
    %v25 = vld [vmem:[%s1 + $0x8] sm:$0xff]
    %v26 = vld [vmem:[%s1 + $0x10] sm:$0xff]
    %v27 = vld [vmem:[%s1 + $0x18] sm:$0xff]
    %v28 = vld [vmem:[%s1 + $0x20] sm:$0xff]
    %v29 = vld [vmem:[%s1 + $0x28] sm:$0xf]
    %v30 = vld [vmem:[%s1 + $0x30] sm:$0xff]
    %v31 = vld [vmem:[%s1 + $0x38] sm:$0xff]
    %v32 = vld [vmem:[%s1 + $0x40] sm:$0xff]
    %v33 = vld [vmem:[%s1 + $0x48] sm:$0xff]
    %v34 = vld [vmem:[%s1 + $0x50] sm:$0xff]
    %v35 = vld [vmem:[%s1 + $0x58] sm:$0xf]
    %v36 = vlaneseq
    %v37 = vshrl.u32 %v36, 7
    %v38 = vsub.s32 7, %v37
    %v39 = vrot.slane %v16, %v38
    %v40 = vlaneseq
    %v41 = vshrl.u32 %v40, 7
    %v42 = vsub.s32 7, %v41
    %v43 = vrot.slane %v22, %v42
    %v44 = vsub.f32 %v12, %v39
    %v45 = vsub.f32 %v13, %v39
    %v46 = vsub.f32 %v14, %v39
    %v47 = vsub.f32 %v15, %v39
    %v48 = vsub.f32 %v16, %v39
    %v49 = vsub.f32 %v17, %v39
    %v50 = vsub.f32 %v18, %v43
    %v51 = vsub.f32 %v19, %v43
    %v52 = vsub.f32 %v20, %v43
    %v53 = vsub.f32 %v21, %v43
    %v54 = vsub.f32 %v22, %v43
    %v55 = vsub.f32 %v23, %v43
    %v56 = vlaneseq
    %v57 = vshrl.u32 %v56, 7
    %v58 = vsub.s32 7, %v57
    %v59 = vrot.slane %v28, %v58
    %v60 = vlaneseq
    %v61 = vshrl.u32 %v60, 7
    %v62 = vsub.s32 7, %v61
    %v63 = vrot.slane %v34, %v62
    %v64 = vsub.f32 %v24, %v59
    %v65 = vsub.f32 %v25, %v59
    %v66 = vsub.f32 %v26, %v59
    %v67 = vsub.f32 %v27, %v59
    %v68 = vsub.f32 %v28, %v59
    %v69 = vsub.f32 %v29, %v59
    %v70 = vsub.f32 %v30, %v63
    %v71 = vsub.f32 %v31, %v63
    %v72 = vsub.f32 %v32, %v63
    %v73 = vsub.f32 %v33, %v63
    %v74 = vsub.f32 %v34, %v63
    %v75 = vsub.f32 %v35, %v63
    %v76 = vsub.f32 %v44, %v64
    %v77 = vsub.f32 %v45, %v65
    %v78 = vsub.f32 %v46, %v66
    %v79 = vsub.f32 %v47, %v67
    %v80 = vsub.f32 %v48, %v68
    %v81 = vsub.f32 %v49, %v69
    %v82 = vsub.f32 %v50, %v70
    %v83 = vsub.f32 %v51, %v71
    %v84 = vsub.f32 %v52, %v72
    %v85 = vsub.f32 %v53, %v73
    %v86 = vsub.f32 %v54, %v74
    %v87 = vsub.f32 %v55, %v75
    %v88 = vand.u32 2147483647, %v76
    %v89 = vand.u32 2147483647, %v77
    %v90 = vand.u32 2147483647, %v78
    %v91 = vand.u32 2147483647, %v79
    %v92 = vand.u32 2147483647, %v80
    %v93 = vand.u32 2147483647, %v81
    %v94 = vand.u32 2147483647, %v82
    %v95 = vand.u32 2147483647, %v83
    %v96 = vand.u32 2147483647, %v84
    %v97 = vand.u32 2147483647, %v85
    %v98 = vand.u32 2147483647, %v86
    %v99 = vand.u32 2147483647, %v87
    %vm100 = vcmask 23552
    %v101 = vsel %vm100, %v88, 0.0
    %102 = vadd.xlane.f32.xlu0 %v101
    %v103 = vpop.xlane.xlu0 %102
    %v104 = vsel %vm100, %v89, 0.0
    %105 = vadd.xlane.f32.xlu0 %v104
    %v106 = vpop.xlane.xlu0 %105
    %v107 = vsel %vm100, %v90, 0.0
    %108 = vadd.xlane.f32.xlu0 %v107
    %v109 = vpop.xlane.xlu0 %108
    %v110 = vsel %vm100, %v91, 0.0
    %111 = vadd.xlane.f32.xlu0 %v110
    %v112 = vpop.xlane.xlu0 %111
    %v113 = vsel %vm100, %v92, 0.0
    %114 = vadd.xlane.f32.xlu0 %v113
    %v115 = vpop.xlane.xlu0 %114
    %vm116 = vcmask 19456
    %v117 = vsel %vm116, %v93, 0.0
    %118 = vadd.xlane.f32.xlu0 %v117
    %v119 = vpop.xlane.xlu0 %118
    %v120 = vsel %vm100, %v94, 0.0
    %121 = vadd.xlane.f32.xlu0 %v120
    %v122 = vpop.xlane.xlu0 %121
    %v123 = vsel %vm100, %v95, 0.0
    %124 = vadd.xlane.f32.xlu0 %v123
    %v125 = vpop.xlane.xlu0 %124
    %v126 = vsel %vm100, %v96, 0.0
    %127 = vadd.xlane.f32.xlu0 %v126
    %v128 = vpop.xlane.xlu0 %127
    %v129 = vsel %vm100, %v97, 0.0
    %130 = vadd.xlane.f32.xlu0 %v129
    %v131 = vpop.xlane.xlu0 %130
    %v132 = vsel %vm100, %v98, 0.0
    %133 = vadd.xlane.f32.xlu0 %v132
    %v134 = vpop.xlane.xlu0 %133
    %v135 = vsel %vm116, %v99, 0.0
    %136 = vadd.xlane.f32.xlu0 %v135
    %v137 = vpop.xlane.xlu0 %136
    %v138 = vmul.f32 %v24, %v103
    %v139 = vmul.f32 %v25, %v106
    %v140 = vmul.f32 %v26, %v109
    %v141 = vmul.f32 %v27, %v112
    %v142 = vmul.f32 %v28, %v115
    %v143 = vmul.f32 %v29, %v119
    %v144 = vmul.f32 %v30, %v122
    %v145 = vmul.f32 %v31, %v125
    %v146 = vmul.f32 %v32, %v128
    %v147 = vmul.f32 %v33, %v131
    %v148 = vmul.f32 %v34, %v134
    %v149 = vmul.f32 %v35, %v137
    %162 = vrot.lane.b32.xlu0 %v138, 125
    %v163 = vpop.permute.xlu0 %162
    %164 = vrot.lane.b32.xlu0 %v139, 125
    %v165 = vpop.permute.xlu0 %164
    %166 = vrot.lane.b32.xlu0 %v140, 125
    %v167 = vpop.permute.xlu0 %166
    %168 = vrot.lane.b32.xlu0 %v141, 125
    %v169 = vpop.permute.xlu0 %168
    %170 = vrot.lane.b32.xlu0 %v142, 125
    %v171 = vpop.permute.xlu0 %170
    %172 = vrot.lane.b32.xlu0 %v143, 125
    %v173 = vpop.permute.xlu0 %172
    %174 = vrot.lane.b32.xlu0 %v144, 125
    %v175 = vpop.permute.xlu0 %174
    %176 = vrot.lane.b32.xlu0 %v145, 125
    %v177 = vpop.permute.xlu0 %176
    %178 = vrot.lane.b32.xlu0 %v146, 125
    %v179 = vpop.permute.xlu0 %178
    %180 = vrot.lane.b32.xlu0 %v147, 125
    %v181 = vpop.permute.xlu0 %180
    %182 = vrot.lane.b32.xlu0 %v148, 125
    %v183 = vpop.permute.xlu0 %182
    %184 = vrot.lane.b32.xlu0 %v149, 125
    %v185 = vpop.permute.xlu0 %184
    %vm198 = vcmask 7168
    %v199 = vsel %vm198, %v163, 0.0
    %v200 = vsel %vm198, %v165, 0.0
    %v201 = vadd.f32 %v199, %v200
    %v202 = vsel %vm198, %v167, 0.0
    %v203 = vadd.f32 %v201, %v202
    %v204 = vsel %vm198, %v169, 0.0
    %v205 = vadd.f32 %v203, %v204
    %v206 = vsel %vm198, %v171, 0.0
    %v207 = vadd.f32 %v205, %v206
    %vm208 = vcmask 3072
    %v209 = vsel %vm208, %v173, 0.0
    %v210 = vadd.f32 %v207, %v209
    %v211 = vsel %vm198, %v175, 0.0
    %v212 = vadd.f32 %v210, %v211
    %v213 = vsel %vm198, %v177, 0.0
    %v214 = vadd.f32 %v212, %v213
    %v215 = vsel %vm198, %v179, 0.0
    %v216 = vadd.f32 %v214, %v215
    %v217 = vsel %vm198, %v181, 0.0
    %v218 = vadd.f32 %v216, %v217
    %v219 = vsel %vm198, %v183, 0.0
    %v220 = vadd.f32 %v218, %v219
    %v221 = vsel %vm208, %v185, 0.0
    %v222 = vadd.f32 %v220, %v221
    %223 = vadd.xlane.f32.xlu0 %v222
    %v224 = vpop.xlane.xlu0 %223
    %v225 = vrot.slane %v224, 4
    %v226 = vadd.f32 %v224, %v225
    %v227 = vrot.slane %v226, 2
    %v228 = vadd.f32 %v226, %v227
    %v229 = vrot.slane %v228, 1
    %v230 = vadd.f32 %v228, %v229
    %s231 = vtos %v230
    %s232 = scalar_lea.smem [#allocation2], 0
    %233 = sst [smem:[%s232]] %s231
    // Predicated region
    $region10: #{tpu_custom_call.1} parent=1 // pred_check
      _
    $region11: #{tpu_custom_call.1} parent=1 // pred_check_branch
      %235 = sbr.rel (0) target = $region13
    $region12: #{tpu_custom_call.1} parent=1 // pred_region
      %s237 = ssub.s32 16, 16
      %238 = vsyncadd [#allocation3], %s237
      %241 = dma.smem_to_hbm [#allocation2], 16, %s2, [#allocation3]
    $region13: #{tpu_custom_call.1} parent=1 // pred_fallthru
      _
    // Predicated region
    $region14: #{tpu_custom_call.1} parent=1 // pred_check
      _
    $region15: #{tpu_custom_call.1} parent=1 // pred_check_branch
      %243 = sbr.rel (0) target = $region17
    $region16: #{tpu_custom_call.1} parent=1 // pred_region
      %244 = dma.done [#allocation3], 16
    $region17: #{tpu_custom_call.1} parent=1 // pred_fallthru
      _
    %245 = sfence
    %246 = vsyncpa [#allocation3], 1

</llo_original>
